<compile_context>
chip_gen: v5e
topology: v5e:2x2
jax: 0.10.0
libtpu: 0.0.40
codegen_flags: <defaults>
</compile_context>

<pallas_src>
import jax
import jax.numpy as jnp
from jax import lax
from jax.experimental import pallas as pl
from jax.experimental.pallas import tpu as pltpu


def _circular_tanh_kernel(v_ref, o_ref):
    # Tile shape: (block_rows, D).  Compute in f32, cast back on store.
    v = v_ref[...].astype(jnp.float32)
    sumsq = jnp.sum(v * v, axis=-1, keepdims=True)   # (block_rows, 1)
    inv_r = lax.rsqrt(sumsq)                          # 1 / ||v||      (EUP)
    r = sumsq * inv_r                                 # ||v||  without sqrt or divide
    scale = jnp.tanh(r) * inv_r                       # tanh(||v||) / ||v||
    # NOTE: rows with ||v|| == 0 produce NaN, matching the PyTorch reference (r_/r).
    o_ref[...] = (scale * v).astype(o_ref.dtype)


def circular_tanh(v, *, target_tile_bytes=2 * 1024 * 1024, max_block_rows=8192):
    """(tanh(||v||)/||v||) * v with the norm over the last axis, via Pallas on TPU."""
    orig_shape = v.shape
    D = orig_shape[-1]
    R = v.size // D

    # Free reshape: leading dims are contiguous in row-major order.
    v2d = jnp.reshape(v, (R, D))

    itemsize = jnp.dtype(v.dtype).itemsize
    # Sublane multiple for this dtype (8 for f32, 16 for bf16, 32 for int8).
    sub = max(8, 32 // itemsize)

    # Row-tile sized for HBM streaming (~target_tile_bytes per buffer), clamped so a
    # single block never exceeds the (rounded-up) row count.
    block_rows = max(sub, min(max_block_rows, target_tile_bytes // max(D * itemsize, 1)))
    block_rows = (block_rows // sub) * sub
    rows_ceil = pl.cdiv(R, sub) * sub
    block_rows = min(block_rows, rows_ceil)

    grid = (pl.cdiv(R, block_rows),)

    out2d = pl.pallas_call(
        _circular_tanh_kernel,
        out_shape=jax.ShapeDtypeStruct((R, D), v.dtype),
        grid_spec=pltpu.PrefetchScalarGridSpec(
            num_scalar_prefetch=0,
            grid=grid,
            in_specs=[pl.BlockSpec((block_rows, D), lambda i: (i, 0))],
            out_specs=pl.BlockSpec((block_rows, D), lambda i: (i, 0)),
        ),
        compiler_params=pltpu.CompilerParams(
            dimension_semantics=("parallel",),
        ),
    )(v2d)

    return jnp.reshape(out2d, orig_shape)


if __name__ == "__main__":
    key = jax.random.PRNGKey(0)
    # Vectors of dim 16 over a (2, 4, 16) batch of positions (NCHW-like layout,
    # norm taken over the last dim as in the PyTorch module).
    x = jax.random.normal(key, (2, 4, 16, 16), dtype=jnp.float32) * 2.0

    out = circular_tanh(x)
    out = jax.block_until_ready(out)

    # Reference check against plain JAX.
    r = jnp.linalg.norm(x, axis=-1, keepdims=True)
    ref = (jnp.tanh(r) / r) * x
    assert out.shape == x.shape and out.dtype == x.dtype
    assert jnp.max(jnp.abs(out - ref)) < 1e-4

    print("KERNEL_OK")
</pallas_src>

<mosaic_0001>
module attributes {stable_mosaic.version = 11 : i64} {
  func.func @_circular_tanh_kernel(%arg0: i32, %arg1: memref<128x16xf32, #tpu.memory_space<vmem>>, %arg2: memref<128x16xf32, #tpu.memory_space<vmem>>) attributes {dimension_semantics = [#tpu.dimension_semantics<parallel>], iteration_bounds = array<i64: 1>, scalar_prefetch = 0 : i64, scratch_operands = 0 : i64, tpu.core_type = #tpu.core_type<tc>, window_params = [{transform_indices = @transform_0, window_bounds = array<i64: 128, 16>}, {transform_indices = @transform_1, window_bounds = array<i64: 128, 16>}]} {
    %c0 = arith.constant 0 : index
    %c0_0 = arith.constant 0 : index
    %0 = vector.load %arg1[%c0, %c0_0] : memref<128x16xf32, #tpu.memory_space<vmem>>, vector<128x16xf32>
    %1 = arith.mulf %0, %0 : vector<128x16xf32>
    %cst = arith.constant dense<0.000000e+00> : vector<128xf32>
    %2 = vector.multi_reduction <add>, %1, %cst [1] : vector<128x16xf32> to vector<128xf32>
    %3 = vector.shape_cast %2 : vector<128xf32> to vector<128x1xf32>
    %4 = math.rsqrt %3 : vector<128x1xf32>
    %5 = arith.mulf %3, %4 : vector<128x1xf32>
    %6 = math.tanh %5 : vector<128x1xf32>
    %7 = arith.mulf %6, %4 : vector<128x1xf32>
    %8 = vector.broadcast %7 : vector<128x1xf32> to vector<128x16xf32>
    %9 = arith.mulf %8, %0 : vector<128x16xf32>
    %c0_1 = arith.constant 0 : index
    %c0_2 = arith.constant 0 : index
    %10 = vector.load %arg2[%c0_1, %c0_2] : memref<128x16xf32, #tpu.memory_space<vmem>>, vector<128x16xf32>
    tpu.vector_store %arg2[%c0_1, %c0_2], %9 {strides = array<i32>} : memref<128x16xf32, #tpu.memory_space<vmem>>, vector<128x16xf32>,
    return
  }
  func.func @transform_0(%arg0: i32) -> (i32, i32) {
    %c0_i32 = arith.constant 0 : i32
    %c0_i32_0 = arith.constant 0 : i32
    return %arg0, %c0_i32 : i32, i32
  }
  func.func @transform_1(%arg0: i32) -> (i32, i32) {
    %c0_i32 = arith.constant 0 : i32
    %c0_i32_0 = arith.constant 0 : i32
    return %arg0, %c0_i32 : i32, i32
  }
}

</mosaic_0001>

<llo_original>
// kernel: tpu_custom_call.1
$region0: #{tpu_custom_call.1}
  #allocation0 [shape = 'u32[]', space=smem, size = 0x4, offset = 0x4, fixed_abs, tag = 'smem constant byte address 0x4 - core index']
  #allocation1 [shape = 'u32[72,128]{1,0:T(1,128)}', space=vmem, size = 0x9000, scoped, tag = 'internal scratch']
  %s0 = inlined_call_operand.vmem [shape: f32[128,16], index: 0, kind: input, shape index: {}]
  %s1 = inlined_call_operand.vmem [shape: f32[128,16], index: 1, kind: output, shape index: {}]
  %s2 = sld [smem:[#allocation0]]
  $region14: #{tpu_custom_call.1} parent=0
    _
  %s4 = ssub.s32 1, %s2
  %s5 = scalar_select 0, %s4, %s2
  // Predicated region
  $region2: #{tpu_custom_call.1} parent=0 // pred_check
    _
  $region3: #{tpu_custom_call.1} parent=0 // pred_check_branch
    %7 = sbr.rel (0) target = $region5
  $region4: #{tpu_custom_call.1} parent=0 // pred_region
    _
  $region5: #{tpu_custom_call.1} parent=0 // pred_fallthru
    _
  %v8 = vld [vmem:[%s0] sm:$0xff]
  %v9 = vld [vmem:[%s0 + $0x8] sm:$0xff]
  %v10 = vld [vmem:[%s0 + $0x10] sm:$0xff]
  %v11 = vld [vmem:[%s0 + $0x18] sm:$0xff]
  %v12 = vld [vmem:[%s0 + $0x20] sm:$0xff]
  %v13 = vld [vmem:[%s0 + $0x28] sm:$0xff]
  %v14 = vld [vmem:[%s0 + $0x30] sm:$0xff]
  %v15 = vld [vmem:[%s0 + $0x38] sm:$0xff]
  %v16 = vld [vmem:[%s0 + $0x40] sm:$0xff]
  %v17 = vld [vmem:[%s0 + $0x48] sm:$0xff]
  %v18 = vld [vmem:[%s0 + $0x50] sm:$0xff]
  %v19 = vld [vmem:[%s0 + $0x58] sm:$0xff]
  %v20 = vld [vmem:[%s0 + $0x60] sm:$0xff]
  %v21 = vld [vmem:[%s0 + $0x68] sm:$0xff]
  %v22 = vld [vmem:[%s0 + $0x70] sm:$0xff]
  %v23 = vld [vmem:[%s0 + $0x78] sm:$0xff]
  %v24 = vmul.f32 %v8, %v8
  %v25 = vmul.f32 %v9, %v9
  %v26 = vmul.f32 %v10, %v10
  %v27 = vmul.f32 %v11, %v11
  %v28 = vmul.f32 %v12, %v12
  %v29 = vmul.f32 %v13, %v13
  %v30 = vmul.f32 %v14, %v14
  %v31 = vmul.f32 %v15, %v15
  %v32 = vmul.f32 %v16, %v16
  %v33 = vmul.f32 %v17, %v17
  %v34 = vmul.f32 %v18, %v18
  %v35 = vmul.f32 %v19, %v19
  %v36 = vmul.f32 %v20, %v20
  %v37 = vmul.f32 %v21, %v21
  %v38 = vmul.f32 %v22, %v22
  %v39 = vmul.f32 %v23, %v23
  %vm40 = vcmask 130048
  %v41 = vsel %vm40, %v24, 0.0
  %42 = vadd.xlane.f32.xlu0 %v41
  %v43 = vpop.xlane.xlu0 %42
  %v44 = vsel %vm40, %v25, 0.0
  %45 = vadd.xlane.f32.xlu0 %v44
  %v46 = vpop.xlane.xlu0 %45
  %v47 = vsel %vm40, %v26, 0.0
  %48 = vadd.xlane.f32.xlu0 %v47
  %v49 = vpop.xlane.xlu0 %48
  %v50 = vsel %vm40, %v27, 0.0
  %51 = vadd.xlane.f32.xlu0 %v50
  %v52 = vpop.xlane.xlu0 %51
  %v53 = vsel %vm40, %v28, 0.0
  %54 = vadd.xlane.f32.xlu0 %v53
  %v55 = vpop.xlane.xlu0 %54
  %v56 = vsel %vm40, %v29, 0.0
  %57 = vadd.xlane.f32.xlu0 %v56
  %v58 = vpop.xlane.xlu0 %57
  %v59 = vsel %vm40, %v30, 0.0
  %60 = vadd.xlane.f32.xlu0 %v59
  %v61 = vpop.xlane.xlu0 %60
  %v62 = vsel %vm40, %v31, 0.0
  %63 = vadd.xlane.f32.xlu0 %v62
  %v64 = vpop.xlane.xlu0 %63
  %v65 = vsel %vm40, %v32, 0.0
  %66 = vadd.xlane.f32.xlu0 %v65
  %v67 = vpop.xlane.xlu0 %66
  %v68 = vsel %vm40, %v33, 0.0
  %69 = vadd.xlane.f32.xlu0 %v68
  %v70 = vpop.xlane.xlu0 %69
  %v71 = vsel %vm40, %v34, 0.0
  %72 = vadd.xlane.f32.xlu0 %v71
  %v73 = vpop.xlane.xlu0 %72
  %v74 = vsel %vm40, %v35, 0.0
  %75 = vadd.xlane.f32.xlu0 %v74
  %v76 = vpop.xlane.xlu0 %75
  %v77 = vsel %vm40, %v36, 0.0
  %78 = vadd.xlane.f32.xlu0 %v77
  %v79 = vpop.xlane.xlu0 %78
  %v80 = vsel %vm40, %v37, 0.0
  %81 = vadd.xlane.f32.xlu0 %v80
  %v82 = vpop.xlane.xlu0 %81
  %v83 = vsel %vm40, %v38, 0.0
  %84 = vadd.xlane.f32.xlu0 %v83
  %v85 = vpop.xlane.xlu0 %84
  %v86 = vsel %vm40, %v39, 0.0
  %87 = vadd.xlane.f32.xlu0 %v86
  %v88 = vpop.xlane.xlu0 %87
  %v89 = vrsqrt.pop %v43
  %v90 = vmul.f32 %v89, %v43
  %v91 = vmul.f32 %v90, %v89
  %v92 = vmul.f32 0.5, %v91
  %v93 = vsub.f32 1.5, %v92
  %v94 = vmul.f32 %v89, %v93
  %vm95 = vweird.f32 %v43
  %vm96 = vweird.f32 %v89
  %vm97 = vmor %vm95, %vm96
  %v98 = vsel %vm97, %v89, %v94
  %v99 = vrsqrt.pop %v46
  %v100 = vmul.f32 %v99, %v46
  %v101 = vmul.f32 %v100, %v99
  %v102 = vmul.f32 0.5, %v101
  %v103 = vsub.f32 1.5, %v102
  %v104 = vmul.f32 %v99, %v103
  %vm105 = vweird.f32 %v46
  %vm106 = vweird.f32 %v99
  %vm107 = vmor %vm105, %vm106
  %v108 = vsel %vm107, %v99, %v104
  %v109 = vrsqrt.pop %v49
  %v110 = vmul.f32 %v109, %v49
  %v111 = vmul.f32 %v110, %v109
  %v112 = vmul.f32 0.5, %v111
  %v113 = vsub.f32 1.5, %v112
  %v114 = vmul.f32 %v109, %v113
  %vm115 = vweird.f32 %v49
  %vm116 = vweird.f32 %v109
  %vm117 = vmor %vm115, %vm116
  %v118 = vsel %vm117, %v109, %v114
  %v119 = vrsqrt.pop %v52
  %v120 = vmul.f32 %v119, %v52
  %v121 = vmul.f32 %v120, %v119
  %v122 = vmul.f32 0.5, %v121
  %v123 = vsub.f32 1.5, %v122
  %v124 = vmul.f32 %v119, %v123
  %vm125 = vweird.f32 %v52
  %vm126 = vweird.f32 %v119
  %vm127 = vmor %vm125, %vm126
  %v128 = vsel %vm127, %v119, %v124
  %v129 = vrsqrt.pop %v55
  %v130 = vmul.f32 %v129, %v55
  %v131 = vmul.f32 %v130, %v129
  %v132 = vmul.f32 0.5, %v131
  %v133 = vsub.f32 1.5, %v132
  %v134 = vmul.f32 %v129, %v133
  %vm135 = vweird.f32 %v55
  %vm136 = vweird.f32 %v129
  %vm137 = vmor %vm135, %vm136
  %v138 = vsel %vm137, %v129, %v134
  %v139 = vrsqrt.pop %v58
  %v140 = vmul.f32 %v139, %v58
  %v141 = vmul.f32 %v140, %v139
  %v142 = vmul.f32 0.5, %v141
  %v143 = vsub.f32 1.5, %v142
  %v144 = vmul.f32 %v139, %v143
  %vm145 = vweird.f32 %v58
  %vm146 = vweird.f32 %v139
  %vm147 = vmor %vm145, %vm146
  %v148 = vsel %vm147, %v139, %v144
  %v149 = vrsqrt.pop %v61
  %v150 = vmul.f32 %v149, %v61
  %v151 = vmul.f32 %v150, %v149
  %v152 = vmul.f32 0.5, %v151
  %v153 = vsub.f32 1.5, %v152
  %v154 = vmul.f32 %v149, %v153
  %vm155 = vweird.f32 %v61
  %vm156 = vweird.f32 %v149
  %vm157 = vmor %vm155, %vm156
  %v158 = vsel %vm157, %v149, %v154
  %v159 = vrsqrt.pop %v64
  %v160 = vmul.f32 %v159, %v64
  %v161 = vmul.f32 %v160, %v159
  %v162 = vmul.f32 0.5, %v161
  %v163 = vsub.f32 1.5, %v162
  %v164 = vmul.f32 %v159, %v163
  %vm165 = vweird.f32 %v64
  %vm166 = vweird.f32 %v159
  %vm167 = vmor %vm165, %vm166
  %v168 = vsel %vm167, %v159, %v164
  %v169 = vrsqrt.pop %v67
  %v170 = vmul.f32 %v169, %v67
  %v171 = vmul.f32 %v170, %v169
  %v172 = vmul.f32 0.5, %v171
  %v173 = vsub.f32 1.5, %v172
  %v174 = vmul.f32 %v169, %v173
  %vm175 = vweird.f32 %v67
  %vm176 = vweird.f32 %v169
  %vm177 = vmor %vm175, %vm176
  %v178 = vsel %vm177, %v169, %v174
  %v179 = vrsqrt.pop %v70
  %v180 = vmul.f32 %v179, %v70
  %v181 = vmul.f32 %v180, %v179
  %v182 = vmul.f32 0.5, %v181
  %v183 = vsub.f32 1.5, %v182
  %v184 = vmul.f32 %v179, %v183
  %vm185 = vweird.f32 %v70
  %vm186 = vweird.f32 %v179
  %vm187 = vmor %vm185, %vm186
  %v188 = vsel %vm187, %v179, %v184
  %v189 = vrsqrt.pop %v73
  %v190 = vmul.f32 %v189, %v73
  %v191 = vmul.f32 %v190, %v189
  %v192 = vmul.f32 0.5, %v191
  %v193 = vsub.f32 1.5, %v192
  %v194 = vmul.f32 %v189, %v193
  %vm195 = vweird.f32 %v73
  %vm196 = vweird.f32 %v189
  %vm197 = vmor %vm195, %vm196
  %v198 = vsel %vm197, %v189, %v194
  %v199 = vrsqrt.pop %v76
  %v200 = vmul.f32 %v199, %v76
  %v201 = vmul.f32 %v200, %v199
  %v202 = vmul.f32 0.5, %v201
  %v203 = vsub.f32 1.5, %v202
  %v204 = vmul.f32 %v199, %v203
  %vm205 = vweird.f32 %v76
  %vm206 = vweird.f32 %v199
  %vm207 = vmor %vm205, %vm206
  %v208 = vsel %vm207, %v199, %v204
  %v209 = vrsqrt.pop %v79
  %v210 = vmul.f32 %v209, %v79
  %v211 = vmul.f32 %v210, %v209
  %v212 = vmul.f32 0.5, %v211
  %v213 = vsub.f32 1.5, %v212
  %v214 = vmul.f32 %v209, %v213
  %vm215 = vweird.f32 %v79
  %vm216 = vweird.f32 %v209
  %vm217 = vmor %vm215, %vm216
  %v218 = vsel %vm217, %v209, %v214
  %v219 = vrsqrt.pop %v82
  %v220 = vmul.f32 %v219, %v82
  %v221 = vmul.f32 %v220, %v219
  %v222 = vmul.f32 0.5, %v221
  %v223 = vsub.f32 1.5, %v222
  %v224 = vmul.f32 %v219, %v223
  %vm225 = vweird.f32 %v82
  %vm226 = vweird.f32 %v219
  %vm227 = vmor %vm225, %vm226
  %v228 = vsel %vm227, %v219, %v224
  %v229 = vrsqrt.pop %v85
  %v230 = vmul.f32 %v229, %v85
  %v231 = vmul.f32 %v230, %v229
  %v232 = vmul.f32 0.5, %v231
  %v233 = vsub.f32 1.5, %v232
  %v234 = vmul.f32 %v229, %v233
  %vm235 = vweird.f32 %v85
  %vm236 = vweird.f32 %v229
  %vm237 = vmor %vm235, %vm236
  %v238 = vsel %vm237, %v229, %v234
  %v239 = vrsqrt.pop %v88
  %v240 = vmul.f32 %v239, %v88
  %v241 = vmul.f32 %v240, %v239
  %v242 = vmul.f32 0.5, %v241
  %v243 = vsub.f32 1.5, %v242
  %v244 = vmul.f32 %v239, %v243
  %vm245 = vweird.f32 %v88
  %vm246 = vweird.f32 %v239
  %vm247 = vmor %vm245, %vm246
  %v248 = vsel %vm247, %v239, %v244
  %v249 = vmul.f32 %v43, %v98
  %v250 = vmul.f32 %v46, %v108
  %v251 = vmul.f32 %v49, %v118
  %v252 = vmul.f32 %v52, %v128
  %v253 = vmul.f32 %v55, %v138
  %v254 = vmul.f32 %v58, %v148
  %v255 = vmul.f32 %v61, %v158
  %v256 = vmul.f32 %v64, %v168
  %v257 = vmul.f32 %v67, %v178
  %v258 = vmul.f32 %v70, %v188
  %v259 = vmul.f32 %v73, %v198
  %v260 = vmul.f32 %v76, %v208
  %v261 = vmul.f32 %v79, %v218
  %v262 = vmul.f32 %v82, %v228
  %v263 = vmul.f32 %v85, %v238
  %v264 = vmul.f32 %v88, %v248
  %v265 = vtanh.pop %v249
  %v266 = vtanh.pop %v250
  %v267 = vtanh.pop %v251
  %v268 = vtanh.pop %v252
  %v269 = vtanh.pop %v253
  %v270 = vtanh.pop %v254
  %v271 = vtanh.pop %v255
  %v272 = vtanh.pop %v256
  %v273 = vtanh.pop %v257
  %v274 = vtanh.pop %v258
  %v275 = vtanh.pop %v259
  %v276 = vtanh.pop %v260
  %v277 = vtanh.pop %v261
  %v278 = vtanh.pop %v262
  %v279 = vtanh.pop %v263
  %v280 = vtanh.pop %v264
  %v281 = vmul.f32 %v265, %v98
  %v282 = vmul.f32 %v266, %v108
  %v283 = vmul.f32 %v267, %v118
  %v284 = vmul.f32 %v268, %v128
  %v285 = vmul.f32 %v269, %v138
  %v286 = vmul.f32 %v270, %v148
  %v287 = vmul.f32 %v271, %v158
  %v288 = vmul.f32 %v272, %v168
  %v289 = vmul.f32 %v273, %v178
  %v290 = vmul.f32 %v274, %v188
  %v291 = vmul.f32 %v275, %v198
  %v292 = vmul.f32 %v276, %v208
  %v293 = vmul.f32 %v277, %v218
  %v294 = vmul.f32 %v278, %v228
  %v295 = vmul.f32 %v279, %v238
  %v296 = vmul.f32 %v280, %v248
  %v297 = vmul.f32 %v281, %v8
  %v298 = vmul.f32 %v282, %v9
  %v299 = vmul.f32 %v283, %v10
  %v300 = vmul.f32 %v284, %v11
  %v301 = vmul.f32 %v285, %v12
  %v302 = vmul.f32 %v286, %v13
  %v303 = vmul.f32 %v287, %v14
  %v304 = vmul.f32 %v288, %v15
  %v305 = vmul.f32 %v289, %v16
  %v306 = vmul.f32 %v290, %v17
  %v307 = vmul.f32 %v291, %v18
  %v308 = vmul.f32 %v292, %v19
  %v309 = vmul.f32 %v293, %v20
  %v310 = vmul.f32 %v294, %v21
  %v311 = vmul.f32 %v295, %v22
  %v312 = vmul.f32 %v296, %v23
  %313 = vst.msk [vmem:[%s1] sm:$0xff] %vm40, %v297
  %314 = vst.msk [vmem:[%s1 + $0x8] sm:$0xff] %vm40, %v298
  %315 = vst.msk [vmem:[%s1 + $0x10] sm:$0xff] %vm40, %v299
  %316 = vst.msk [vmem:[%s1 + $0x18] sm:$0xff] %vm40, %v300
  %317 = vst.msk [vmem:[%s1 + $0x20] sm:$0xff] %vm40, %v301
  %318 = vst.msk [vmem:[%s1 + $0x28] sm:$0xff] %vm40, %v302
  %319 = vst.msk [vmem:[%s1 + $0x30] sm:$0xff] %vm40, %v303
  %320 = vst.msk [vmem:[%s1 + $0x38] sm:$0xff] %vm40, %v304
  %321 = vst.msk [vmem:[%s1 + $0x40] sm:$0xff] %vm40, %v305
  %322 = vst.msk [vmem:[%s1 + $0x48] sm:$0xff] %vm40, %v306
  %323 = vst.msk [vmem:[%s1 + $0x50] sm:$0xff] %vm40, %v307
  %324 = vst.msk [vmem:[%s1 + $0x58] sm:$0xff] %vm40, %v308
  %325 = vst.msk [vmem:[%s1 + $0x60] sm:$0xff] %vm40, %v309
  %326 = vst.msk [vmem:[%s1 + $0x68] sm:$0xff] %vm40, %v310
  %327 = vst.msk [vmem:[%s1 + $0x70] sm:$0xff] %vm40, %v311
  %328 = vst.msk [vmem:[%s1 + $0x78] sm:$0xff] %vm40, %v312
  // Predicated region
  $region6: #{tpu_custom_call.1} parent=0 // pred_check
    _
  $region7: #{tpu_custom_call.1} parent=0 // pred_check_branch
    %330 = sbr.rel (0) target = $region9
  $region8: #{tpu_custom_call.1} parent=0 // pred_region
    _
  $region9: #{tpu_custom_call.1} parent=0 // pred_fallthru
    _
  // Predicated region
  $region10: #{tpu_custom_call.1} parent=0 // pred_check
    _
  $region11: #{tpu_custom_call.1} parent=0 // pred_check_branch
    %332 = sbr.rel (0) target = $region13
  $region12: #{tpu_custom_call.1} parent=0 // pred_region
    _
  $region13: #{tpu_custom_call.1} parent=0 // pred_fallthru
    _

</llo_original>
